<compile_context>
chip_gen: v7x
topology: tpu7x:2x2x1
jax: 0.10.0
libtpu: 0.0.40
codegen_flags: <defaults>
</compile_context>

<pallas_src>
import functools

import jax
import jax.numpy as jnp
import numpy as np
from jax.experimental import pallas as pl
from jax.experimental.pallas import tpu as pltpu

_LANES = 128
_MAX_TILE_ROWS = 1024   # 1024*128*4 B = 512 KiB per input per pipeline buffer


def _tripple_partials_kernel(rec_ref, tgt_ref, out_ref):
    # (tile_rows, 128) tiles; arithmetic in f32 regardless of wire dtype.
    r = rec_ref[...].astype(jnp.float32)
    t = tgt_ref[...].astype(jnp.float32)

    rz = jnp.where(r == 0.0, 1.0, 0.0)   # rec is zero
    tz = jnp.where(t == 0.0, 1.0, 0.0)   # tgt is zero

    d = r - t
    dsq = d * d                           # == 0 on TN pixels (both exactly 0)

    # Per-lane (sublane-reduced) partials; keep the lane axis dense (128 wide).
    rows = [
        jnp.sum(dsq, axis=0, keepdims=True),        # 0: total sq err = TP+FN+FP
        jnp.sum(rz * dsq, axis=0, keepdims=True),   # 1: FN sq err (rec==0 -> dsq=t^2)
        jnp.sum(tz * dsq, axis=0, keepdims=True),   # 2: FP sq err (tgt==0 -> dsq=r^2)
        jnp.sum(rz, axis=0, keepdims=True),         # 3: # rec==0   (incl. padding)
        jnp.sum(tz, axis=0, keepdims=True),         # 4: # tgt==0   (incl. padding)
        jnp.sum(rz * tz, axis=0, keepdims=True),    # 5: # both==0  (incl. padding)
        jnp.zeros((2, _LANES), jnp.float32),        # 6-7: pad rows (keep 8x128 store)
    ]
    out_ref[...] = jnp.concatenate(rows, axis=0)


def _round_up(a, b):
    return ((a + b - 1) // b) * b


def tripple_loss(reconstructed_image, target_image, *,
                 tp_weighting=1.0, fp_weighting=1.0, fn_weighting=1.0,
                 tn_weighting=1.0, punishment=0.1):
    """Pallas implementation of TrippleLoss.forward (reduction='mean')."""
    # TODO(synk): only reduction='mean' (the module default) is implemented;
    # Time_Match / full_frame_loss are dead code in the torch forward and are
    # therefore omitted.
    assert reconstructed_image.shape == target_image.shape
    n_real = int(np.prod(reconstructed_image.shape))

    rows_min = pl.cdiv(n_real, _LANES)
    rows8 = _round_up(max(rows_min, 1), 8)                 # sublane multiple
    num_tiles = pl.cdiv(rows8, _MAX_TILE_ROWS)
    tile_rows = _round_up(pl.cdiv(rows8, num_tiles), 8)    # <= _MAX_TILE_ROWS
    rows = num_tiles * tile_rows
    pad = rows * _LANES - n_real

    def _prep(x):
        x = x.reshape(-1)
        if pad:
            x = jnp.concatenate([x, jnp.zeros((pad,), x.dtype)])
        return x.reshape(rows, _LANES)

    rec2 = _prep(reconstructed_image)
    tgt2 = _prep(target_image)

    partials = pl.pallas_call(
        _tripple_partials_kernel,
        out_shape=jax.ShapeDtypeStruct((num_tiles, 8, _LANES), jnp.float32),
        grid_spec=pltpu.PrefetchScalarGridSpec(
            num_scalar_prefetch=0,
            grid=(num_tiles,),
            in_specs=[
                pl.BlockSpec((tile_rows, _LANES), lambda i: (i, 0)),
                pl.BlockSpec((tile_rows, _LANES), lambda i: (i, 0)),
            ],
            out_specs=pl.BlockSpec((None, 8, _LANES), lambda i: (i, 0, 0)),
        ),
        compiler_params=pltpu.CompilerParams(
            dimension_semantics=("parallel",)),
    )(rec2, tgt2)

    s = jnp.sum(partials, axis=(0, 2))                # (8,) final reduction
    total_sq, fn_sq, fp_sq = s[0], s[1], s[2]
    # Padding is (rec==0, tgt==0): subtract it from the three zero counts;
    # it contributes exactly 0 to every squared-error sum.
    padf = jnp.float32(pad)
    rz_cnt = s[3] - padf                              # # rec==0 (real pixels)
    tz_cnt = s[4] - padf                              # # tgt==0 (real pixels)
    tn_cnt = s[5] - padf                              # # both==0 (real pixels)

    fn_cnt = rz_cnt - tn_cnt                          # rec==0 & tgt!=0
    fp_cnt = tz_cnt - tn_cnt                          # tgt==0 & rec!=0
    tp_cnt = jnp.float32(n_real) - rz_cnt - tz_cnt + tn_cnt
    tp_sq = total_sq - fn_sq - fp_sq                  # dsq==0 on TN pixels

    pun = jnp.float32(punishment)
    # Empty-category fallbacks reproduce torch's NaN handling:
    #   empty TP/TN -> punishment; empty FN/FP -> 0; non-empty TN MSE == 0.
    tpl = jnp.where(tp_cnt > 0, tp_sq / jnp.maximum(tp_cnt, 1.0), pun)
    fnl = jnp.where(fn_cnt > 0, fn_sq / jnp.maximum(fn_cnt, 1.0), 0.0)
    fpl = jnp.where(fp_cnt > 0, fp_sq / jnp.maximum(fp_cnt, 1.0), 0.0)
    tnl = jnp.where(tn_cnt > 0, 0.0, pun)

    return (jnp.float32(tp_weighting) * tpl
            + jnp.float32(fn_weighting) * fnl
            + jnp.float32(fp_weighting) * fpl
            + jnp.float32(tn_weighting) * tnl)


def _reference_tripple_loss(rec, tgt, punishment=0.1,
                            TPW=1.0, FPW=1.0, FNW=1.0, TNW=1.0):
    """Pure-numpy transliteration of the PyTorch module (for verification)."""
    rec = np.asarray(rec, np.float64)
    tgt = np.asarray(tgt, np.float64)

    zero_mask = tgt == 0
    nonzero_mask = ~zero_mask
    sm = rec[nonzero_mask]          # signalmasked_output
    zm = rec[zero_mask]             # zeromasked_output

    def mse(a, b):
        if a.size == 0:
            return np.nan           # torch MSELoss(mean) on empty -> nan
        return float(np.mean((a - b) ** 2))

    fn_mask = sm == 0
    tp_mask = ~fn_mask
    FNL = mse(sm[fn_mask], tgt[nonzero_mask][fn_mask])
    TPL = mse(sm[tp_mask], tgt[nonzero_mask][tp_mask])
    tn_mask = zm == 0
    fp_mask = ~tn_mask
    TNL = mse(zm[tn_mask], tgt[zero_mask][tn_mask])
    FPL = mse(zm[fp_mask], tgt[zero_mask][fp_mask])

    if np.isnan(FNL):
        FNL = 0.0
    if np.isnan(FPL):
        FPL = 0.0
    if np.isnan(TNL):
        TNL = punishment
    if np.isnan(TPL):
        TPL = punishment
    return TPW * TPL + FNW * FNL + FPW * FPL + TNW * TNL


if __name__ == "__main__":
    B, C, H, W = 2, 4, 16, 16

    key = jax.random.PRNGKey(0)
    k1, k2, k3, k4 = jax.random.split(key, 4)
    # Sparse images with exact zeros so that all four categories
    # (TP / FN / FP / TN) are populated, like the TOF data the module expects.
    tgt = (jax.random.uniform(k1, (B, C, H, W), jnp.float32)
           * jax.random.bernoulli(k2, 0.4, (B, C, H, W)).astype(jnp.float32))
    rec = (jax.random.uniform(k3, (B, C, H, W), jnp.float32)
           * jax.random.bernoulli(k4, 0.5, (B, C, H, W)).astype(jnp.float32))

    loss = tripple_loss(rec, tgt)
    loss = jax.block_until_ready(loss)

    ref = _reference_tripple_loss(rec, tgt)
    np.testing.assert_allclose(float(loss), float(ref), rtol=1e-5, atol=1e-6)

    print("KERNEL_OK")
</pallas_src>

<mosaic_0001>
module attributes {stable_mosaic.version = 11 : i64} {
  func.func @_tripple_partials_kernel(%arg0: i32, %arg1: memref<16x128xf32, #tpu.memory_space<vmem>>, %arg2: memref<16x128xf32, #tpu.memory_space<vmem>>, %arg3: memref<1x8x128xf32, #tpu.memory_space<vmem>>) attributes {dimension_semantics = [#tpu.dimension_semantics<parallel>], iteration_bounds = array<i64: 1>, scalar_prefetch = 0 : i64, scratch_operands = 0 : i64, tpu.core_type = #tpu.core_type<tc>, window_params = [{transform_indices = @transform_0, window_bounds = array<i64: 16, 128>}, {transform_indices = @transform_1, window_bounds = array<i64: 16, 128>}, {transform_indices = @transform_2, window_bounds = array<i64: 1, 8, 128>}]} {
    %c0 = arith.constant 0 : index
    %c0_0 = arith.constant 0 : index
    %0 = vector.load %arg1[%c0, %c0_0] : memref<16x128xf32, #tpu.memory_space<vmem>>, vector<16x128xf32>
    %c0_1 = arith.constant 0 : index
    %c0_2 = arith.constant 0 : index
    %1 = vector.load %arg2[%c0_1, %c0_2] : memref<16x128xf32, #tpu.memory_space<vmem>>, vector<16x128xf32>
    %cst = arith.constant 0.000000e+00 : f32
    %2 = vector.broadcast %cst : f32 to vector<16x128xf32>
    %3 = arith.cmpf oeq, %0, %2 : vector<16x128xf32>
    %cst_3 = arith.constant 1.000000e+00 : f32
    %cst_4 = arith.constant 0.000000e+00 : f32
    %4 = vector.broadcast %cst_3 : f32 to vector<16x128xf32>
    %5 = vector.broadcast %cst_4 : f32 to vector<16x128xf32>
    %6 = arith.select %3, %4, %5 : vector<16x128xi1>, vector<16x128xf32>
    %cst_5 = arith.constant 0.000000e+00 : f32
    %7 = vector.broadcast %cst_5 : f32 to vector<16x128xf32>
    %8 = arith.cmpf oeq, %1, %7 : vector<16x128xf32>
    %cst_6 = arith.constant 1.000000e+00 : f32
    %cst_7 = arith.constant 0.000000e+00 : f32
    %9 = vector.broadcast %cst_6 : f32 to vector<16x128xf32>
    %10 = vector.broadcast %cst_7 : f32 to vector<16x128xf32>
    %11 = arith.select %8, %9, %10 : vector<16x128xi1>, vector<16x128xf32>
    %12 = arith.subf %0, %1 : vector<16x128xf32>
    %13 = arith.mulf %12, %12 : vector<16x128xf32>
    %cst_8 = arith.constant dense<0.000000e+00> : vector<128xf32>
    %14 = vector.multi_reduction <add>, %13, %cst_8 [0] : vector<16x128xf32> to vector<128xf32>
    %15 = vector.shape_cast %14 : vector<128xf32> to vector<1x128xf32>
    %16 = arith.mulf %6, %13 : vector<16x128xf32>
    %cst_9 = arith.constant dense<0.000000e+00> : vector<128xf32>
    %17 = vector.multi_reduction <add>, %16, %cst_9 [0] : vector<16x128xf32> to vector<128xf32>
    %18 = vector.shape_cast %17 : vector<128xf32> to vector<1x128xf32>
    %19 = arith.mulf %11, %13 : vector<16x128xf32>
    %cst_10 = arith.constant dense<0.000000e+00> : vector<128xf32>
    %20 = vector.multi_reduction <add>, %19, %cst_10 [0] : vector<16x128xf32> to vector<128xf32>
    %21 = vector.shape_cast %20 : vector<128xf32> to vector<1x128xf32>
    %cst_11 = arith.constant dense<0.000000e+00> : vector<128xf32>
    %22 = vector.multi_reduction <add>, %6, %cst_11 [0] : vector<16x128xf32> to vector<128xf32>
    %23 = vector.shape_cast %22 : vector<128xf32> to vector<1x128xf32>
    %cst_12 = arith.constant dense<0.000000e+00> : vector<128xf32>
    %24 = vector.multi_reduction <add>, %11, %cst_12 [0] : vector<16x128xf32> to vector<128xf32>
    %25 = vector.shape_cast %24 : vector<128xf32> to vector<1x128xf32>
    %26 = arith.mulf %6, %11 : vector<16x128xf32>
    %cst_13 = arith.constant dense<0.000000e+00> : vector<128xf32>
    %27 = vector.multi_reduction <add>, %26, %cst_13 [0] : vector<16x128xf32> to vector<128xf32>
    %28 = vector.shape_cast %27 : vector<128xf32> to vector<1x128xf32>
    %cst_14 = arith.constant 0.000000e+00 : f32
    %29 = vector.broadcast %cst_14 : f32 to vector<2x128xf32>
    %30 = tpu.concatenate %15, %18, %21, %23, %25, %28, %29 in 0 : vector<1x128xf32>, vector<1x128xf32>, vector<1x128xf32>, vector<1x128xf32>, vector<1x128xf32>, vector<1x128xf32>, vector<2x128xf32> -> vector<8x128xf32>
    %c0_15 = arith.constant 0 : index
    %c0_16 = arith.constant 0 : index
    %c0_17 = arith.constant 0 : index
    %31 = vector.load %arg3[%c0_15, %c0_16, %c0_17] : memref<1x8x128xf32, #tpu.memory_space<vmem>>, vector<1x8x128xf32>
    %32 = vector.shape_cast %31 : vector<1x8x128xf32> to vector<8x128xf32>
    %33 = vector.shape_cast %30 : vector<8x128xf32> to vector<1x8x128xf32>
    tpu.vector_store %arg3[%c0_15, %c0_16, %c0_17], %33 {strides = array<i32>} : memref<1x8x128xf32, #tpu.memory_space<vmem>>, vector<1x8x128xf32>,
    return
  }
  func.func @transform_0(%arg0: i32) -> (i32, i32) {
    %c0_i32 = arith.constant 0 : i32
    %c0_i32_0 = arith.constant 0 : i32
    return %arg0, %c0_i32 : i32, i32
  }
  func.func @transform_1(%arg0: i32) -> (i32, i32) {
    %c0_i32 = arith.constant 0 : i32
    %c0_i32_0 = arith.constant 0 : i32
    return %arg0, %c0_i32 : i32, i32
  }
  func.func @transform_2(%arg0: i32) -> (i32, i32, i32) {
    %c0_i32 = arith.constant 0 : i32
    %c0_i32_0 = arith.constant 0 : i32
    %c0_i32_1 = arith.constant 0 : i32
    return %arg0, %c0_i32, %c0_i32_0 : i32, i32, i32
  }
}

</mosaic_0001>

<llo_original>
// kernel: tpu_custom_call.1
$region0: #{tpu_custom_call.1}
  #allocation0 [shape = 'u32[]', space=smem, size = 0x4, offset = 0x4, fixed_abs, tag = 'smem constant byte address 0x4 - core index']
  #allocation1 [shape = 'u32[144,128]{1,0:T(1,128)}', space=vmem, size = 0x12000, scoped, tag = 'internal scratch']
  %s0 = inlined_call_operand.hbm [shape: f32[16,128], index: 0, kind: input, shape index: {}]
  %s1 = inlined_call_operand.hbm [shape: f32[16,128], index: 1, kind: input, shape index: {}]
  %s2 = inlined_call_operand.hbm [shape: f32[1,8,128], index: 2, kind: output, shape index: {}]
  %s3 = sld [smem:[#allocation0]]
  $region26: #{tpu_custom_call.1} parent=0
    _
  %s5 = ssub.s32 1, %s3
  %s6 = scalar_select 0, %s5, %s3
  $region1: #{tpu_custom_call.1} parent=0
    #allocation2 [shape = 'u8[8192]{0}', space=vmem, size = 0x2000, scoped, tag = 'input window, operand 0, single buffered']
    #allocation3 [shape = 's32[1]{0}', space=sflag, size = 0x4, scoped, tag = 'scoped memory for tpu_custom_call.1']
    #allocation4 [shape = 's32[1]{0}', space=sflag, size = 0x4, scoped, tag = 'scoped memory for tpu_custom_call.1']
    #allocation5 [shape = 'u8[8192]{0}', space=vmem, size = 0x2000, scoped, tag = 'input window, operand 1, single buffered']
    #allocation6 [shape = 's32[1]{0}', space=sflag, size = 0x4, scoped, tag = 'scoped memory for tpu_custom_call.1']
    #allocation7 [shape = 'u8[4096]{0}', space=vmem, size = 0x1000, scoped, tag = 'output window, operand 0, single buffered']
    %7 = vsyncpa [#allocation3], 0
    %8 = vsyncpa [#allocation6], 0
    %9 = vsyncpa [#allocation4], 0
    // Predicated region
    $region2: #{tpu_custom_call.1} parent=1 // pred_check
      _
    $region3: #{tpu_custom_call.1} parent=1 // pred_check_branch
      %11 = sbr.rel (0) target = $region5
    $region4: #{tpu_custom_call.1} parent=1 // pred_region
      %s13 = ssub.s32 256, 256
      %14 = vsyncadd [#allocation3], %s13
      %s15 = sshll.u32 [#allocation2], 4
      %s16 = int_to_ptr.vmem [resolvable:$true] %s15
      %21 = dma.hbm_to_vmem [thread:$0]  %s0, 256, %s16, [#allocation3], 128, 128, 8
    $region5: #{tpu_custom_call.1} parent=1 // pred_fallthru
      _
    // Predicated region
    $region6: #{tpu_custom_call.1} parent=1 // pred_check
      _
    $region7: #{tpu_custom_call.1} parent=1 // pred_check_branch
      %23 = sbr.rel (0) target = $region9
    $region8: #{tpu_custom_call.1} parent=1 // pred_region
      %s25 = ssub.s32 256, 256
      %26 = vsyncadd [#allocation6], %s25
      %s27 = sshll.u32 [#allocation5], 4
      %s28 = int_to_ptr.vmem [resolvable:$true] %s27
      %33 = dma.hbm_to_vmem [thread:$0]  %s1, 256, %s28, [#allocation6], 128, 128, 8
    $region9: #{tpu_custom_call.1} parent=1 // pred_fallthru
      _
    // Predicated region
    $region10: #{tpu_custom_call.1} parent=1 // pred_check
      _
    $region11: #{tpu_custom_call.1} parent=1 // pred_check_branch
      %35 = sbr.rel (0) target = $region13
    $region12: #{tpu_custom_call.1} parent=1 // pred_region
      %36 = dma.done [#allocation3], 256
    $region13: #{tpu_custom_call.1} parent=1 // pred_fallthru
      _
    // Predicated region
    $region14: #{tpu_custom_call.1} parent=1 // pred_check
      _
    $region15: #{tpu_custom_call.1} parent=1 // pred_check_branch
      %38 = sbr.rel (0) target = $region17
    $region16: #{tpu_custom_call.1} parent=1 // pred_region
      %39 = dma.done [#allocation6], 256
    $region17: #{tpu_custom_call.1} parent=1 // pred_fallthru
      _
    %v40 = vld [vmem:[#allocation2] sm:$0xff]
    %v41 = vld [vmem:[#allocation2 + $0x8] sm:$0xff]
    %v42 = vld [vmem:[#allocation5] sm:$0xff]
    %v43 = vld [vmem:[#allocation5 + $0x8] sm:$0xff]
    %vm44 = vcmp.eq.f32.partialorder %v40, 0.0
    %vm45 = vcmp.eq.f32.partialorder %v41, 0.0
    %v46 = vsel %vm44, 1.0, 0.0
    %v47 = vsel %vm45, 1.0, 0.0
    %vm48 = vcmp.eq.f32.partialorder %v42, 0.0
    %vm49 = vcmp.eq.f32.partialorder %v43, 0.0
    %v50 = vsel %vm48, 1.0, 0.0
    %v51 = vsel %vm49, 1.0, 0.0
    %v52 = vsub.f32 %v40, %v42
    %v53 = vsub.f32 %v41, %v43
    %v54 = vmul.f32 %v52, %v52
    %v55 = vmul.f32 %v53, %v53
    %v56 = vadd.f32 %v54, %v55
    %v57 = vrot.slane %v56, 4
    %v58 = vadd.f32 %v56, %v57
    %v59 = vrot.slane %v58, 2
    %v60 = vadd.f32 %v58, %v59
    %v61 = vrot.slane %v60, 1
    %v62 = vadd.f32 %v60, %v61
    %v63 = vmul.f32 %v46, %v54
    %v64 = vmul.f32 %v47, %v55
    %v65 = vadd.f32 %v63, %v64
    %v66 = vrot.slane %v65, 4
    %v67 = vadd.f32 %v65, %v66
    %v68 = vrot.slane %v67, 2
    %v69 = vadd.f32 %v67, %v68
    %v70 = vrot.slane %v69, 1
    %v71 = vadd.f32 %v69, %v70
    %v72 = vmul.f32 %v50, %v54
    %v73 = vmul.f32 %v51, %v55
    %v74 = vadd.f32 %v72, %v73
    %v75 = vrot.slane %v74, 4
    %v76 = vadd.f32 %v74, %v75
    %v77 = vrot.slane %v76, 2
    %v78 = vadd.f32 %v76, %v77
    %v79 = vrot.slane %v78, 1
    %v80 = vadd.f32 %v78, %v79
    %v81 = vadd.f32 %v46, %v47
    %v82 = vrot.slane %v81, 4
    %v83 = vadd.f32 %v81, %v82
    %v84 = vrot.slane %v83, 2
    %v85 = vadd.f32 %v83, %v84
    %v86 = vrot.slane %v85, 1
    %v87 = vadd.f32 %v85, %v86
    %v88 = vadd.f32 %v50, %v51
    %v89 = vrot.slane %v88, 4
    %v90 = vadd.f32 %v88, %v89
    %v91 = vrot.slane %v90, 2
    %v92 = vadd.f32 %v90, %v91
    %v93 = vrot.slane %v92, 1
    %v94 = vadd.f32 %v92, %v93
    %v95 = vmul.f32 %v46, %v50
    %v96 = vmul.f32 %v47, %v51
    %v97 = vadd.f32 %v95, %v96
    %v98 = vrot.slane %v97, 4
    %v99 = vadd.f32 %v97, %v98
    %v100 = vrot.slane %v99, 2
    %v101 = vadd.f32 %v99, %v100
    %v102 = vrot.slane %v101, 1
    %v103 = vadd.f32 %v101, %v102
    %vm104 = vcmask 1040384
    %v105 = vsel %vm104, %v62, %v71
    %vm106 = vcmask 1041408
    %v107 = vsel %vm106, %v105, %v80
    %vm108 = vcmask 1042432
    %v109 = vsel %vm108, %v107, %v87
    %vm110 = vcmask 1043456
    %v111 = vsel %vm110, %v109, %v94
    %vm112 = vcmask 1044480
    %v113 = vsel %vm112, %v111, %v103
    %vm114 = vcmask 1045504
    %v115 = vsel %vm114, %v113, 0.0
    %116 = vst [vmem:[#allocation7] sm:$0xff] %v115
    // Predicated region
    $region18: #{tpu_custom_call.1} parent=1 // pred_check
      _
    $region19: #{tpu_custom_call.1} parent=1 // pred_check_branch
      %118 = sbr.rel (0) target = $region21
    $region20: #{tpu_custom_call.1} parent=1 // pred_region
      %s120 = ssub.s32 128, 128
      %121 = vsyncadd [#allocation4], %s120
      %s123 = sshll.u32 [#allocation7], 4
      %s124 = int_to_ptr.vmem [resolvable:$true] %s123
      %126 = dma.vmem_to_hbm [thread:$0]  %s124, 128, %s2, [#allocation4]
    $region21: #{tpu_custom_call.1} parent=1 // pred_fallthru
      _
    // Predicated region
    $region22: #{tpu_custom_call.1} parent=1 // pred_check
      _
    $region23: #{tpu_custom_call.1} parent=1 // pred_check_branch
      %128 = sbr.rel (0) target = $region25
    $region24: #{tpu_custom_call.1} parent=1 // pred_region
      %129 = dma.done [#allocation4], 128
    $region25: #{tpu_custom_call.1} parent=1 // pred_fallthru
      _
    %130 = vsyncpa [#allocation3], 1
    %131 = vsyncpa [#allocation6], 1
    %132 = vsyncpa [#allocation4], 1

</llo_original>
